<compile_context>
chip_gen: v6e
topology: v6e:2x2x1
jax: 0.10.0
libtpu: 0.0.40
codegen_flags: <defaults>
</compile_context>

<pallas_src>
import functools

import jax
import jax.numpy as jnp
from jax import lax
from jax.experimental import pallas as pl
from jax.experimental.pallas import tpu as pltpu


def _round_up(a, b):
    return ((a + b - 1) // b) * b


def _cdiv(a, b):
    return (a + b - 1) // b


def _weighted_gram_kernel(x_ref, pi_ref, o_ref, *, num_groups):
    """o[0] += X_tile^T @ [pi_0*X_tile | pi_1*X_tile | ...]  over the m grid axis."""
    i = pl.program_id(1)  # reduction axis over sample tiles (innermost)

    @pl.when(i == 0)
    def _():
        o_ref[...] = jnp.zeros_like(o_ref)

    x = x_ref[...]                              # (tm, p), compute dtype
    pi = pi_ref[...].astype(x.dtype)            # (tm, G): cast whole tile once

    # A = concat_g(pi[:, g:g+1] * x) along lanes -> (tm, G*p).  Lane-aligned
    # concat (p is the full feature dim), no relayout.
    a = jnp.concatenate(
        [pi[:, g:g + 1] * x for g in range(num_groups)], axis=1)

    # Single MXU contraction over the leading (sample) axis: (p, G*p) partial,
    # f32 accumulation into the VMEM-resident output block.
    o_ref[0] = o_ref[0] + lax.dot_general(
        x, a,
        dimension_numbers=(((0,), (0,)), ((), ())),
        preferred_element_type=jnp.float32,
    )


def _weighted_grams(x, pi_t, *, tm=1024, n_par=2, compute_dtype=None):
    """G[g] = X^T diag(pi_t[:, g]) X for all columns g; result (G, p, p) f32."""
    m, p = x.shape
    _, num_groups = pi_t.shape

    if compute_dtype is None:
        compute_dtype = x.dtype
    compute_dtype = jnp.dtype(compute_dtype)
    x = x.astype(compute_dtype)
    pi_t = pi_t.astype(jnp.float32)  # keep weights f32 in HBM; cast in-kernel

    # Sublane multiple for the compute dtype (8 f32 / 16 bf16 / 32 int8-fp8).
    sub = {4: 8, 2: 16, 1: 32}.get(compute_dtype.itemsize, 8)

    # Padding-aware tiling of the sample axis, split n_par ways for megacore.
    n_par = max(1, int(n_par))
    m_part = _cdiv(m, n_par)                       # rows per partition
    num_tiles = max(1, _cdiv(m_part, tm))
    tm_eff = _round_up(max(_cdiv(m_part, num_tiles), sub), sub)
    m_part_pad = num_tiles * tm_eff
    m_pad = n_par * m_part_pad
    if m_pad != m:
        # Zero rows contribute nothing to any weighted Gram.
        x = jnp.pad(x, ((0, m_pad - m), (0, 0)))
        pi_t = jnp.pad(pi_t, ((0, m_pad - m), (0, 0)))

    kernel = functools.partial(_weighted_gram_kernel, num_groups=num_groups)

    # VMEM budget: double-buffered x / pi tiles, resident output, A temp.
    est = (2 * tm_eff * p * compute_dtype.itemsize
           + 2 * tm_eff * 128 * 4                       # pi, lane-padded
           + 2 * p * num_groups * p * 4                 # output block
           + tm_eff * num_groups * p * compute_dtype.itemsize)
    vmem_limit = int(min(64 * 2**20, max(8 * 2**20, 2 * est)))

    cost = pl.CostEstimate(
        flops=2 * m_pad * p * num_groups * p + m_pad * num_groups * p,
        transcendentals=0,
        bytes_accessed=(m_pad * p * compute_dtype.itemsize
                        + m_pad * num_groups * 4
                        + n_par * p * num_groups * p * 4),
    )

    out = pl.pallas_call(
        kernel,
        out_shape=jax.ShapeDtypeStruct((n_par, p, num_groups * p), jnp.float32),
        grid_spec=pltpu.PrefetchScalarGridSpec(
            num_scalar_prefetch=0,
            grid=(n_par, num_tiles),
            in_specs=[
                pl.BlockSpec((tm_eff, p),
                             lambda c, i: (c * num_tiles + i, 0)),
                pl.BlockSpec((tm_eff, num_groups),
                             lambda c, i: (c * num_tiles + i, 0)),
            ],
            # Constant index over the reduction axis -> the (1, p, G*p) block is
            # VMEM-resident per partition and doubles as the accumulator.
            out_specs=pl.BlockSpec((1, p, num_groups * p),
                                   lambda c, i: (c, 0, 0)),
        ),
        compiler_params=pltpu.CompilerParams(
            dimension_semantics=("parallel", "arbitrary"),
            vmem_limit_bytes=vmem_limit,
        ),
        cost_estimate=cost,
    )(x, pi_t)

    # Sum the n_par partial accumulators, then (p, G*p) -> (G, p, p).
    grams = out.sum(axis=0).reshape(p, num_groups, p)
    return jnp.transpose(grams, (1, 0, 2))  # each Gram is symmetric


def maximal_coding_rate_reduction(x, y, num_classes=None, eps=0.01, gamma=1.0,
                                  tm=1024, n_par=2, compute_dtype=None):
    """JAX/Pallas forward of MaximalCodingRateReduction.

    x: (m, p) features (rows = samples). y: int labels (m,) or membership (m, k).
    Returns (total_loss, (discrimn_loss, compress_loss)).
    """
    m, p = x.shape
    if y.ndim == 1:
        if num_classes is None:
            # NOTE: concretizes y; pass num_classes explicitly under jax.jit.
            num_classes = int(y.max()) + 1
        pi_t = jax.nn.one_hot(y, num_classes, dtype=jnp.float32)     # (m, k)
        rows_sum_to_one = True
    else:
        if num_classes is None:
            num_classes = y.shape[1]
        pi_t = y.astype(jnp.float32)                                 # (m, k)
        rows_sum_to_one = False

    if rows_sum_to_one:
        # One-hot rows sum to 1 -> X^T X = sum_g X^T diag(pi_g) X; skip the
        # redundant all-ones Gram entirely.
        pi_groups = pi_t
    else:
        # Soft memberships: keep an explicit all-ones column for the total Gram.
        pi_groups = jnp.concatenate([jnp.ones((m, 1), jnp.float32), pi_t], axis=1)

    grams = _weighted_grams(x, pi_groups, tm=tm, n_par=n_par,
                            compute_dtype=compute_dtype)             # (G, p, p) f32

    if rows_sum_to_one:
        gram_cls = grams
        gram_total = grams.sum(axis=0)
    else:
        gram_total = grams[0]
        gram_cls = grams[1:]

    eye = jnp.eye(p, dtype=jnp.float32)

    # Discriminative term: 0.5 * logdet(I + p/(m*eps) * X^T X).
    # TODO(synk): logdet (Cholesky/LU of the small p x p SPD matrix) has no clean
    # Pallas equivalent; it stays in plain JAX (not the hot path).
    scalar_d = p / (m * eps)
    _, logdet_d = jnp.linalg.slogdet(eye + scalar_d * gram_total)
    discrimn_loss = logdet_d / 2.0

    # Compressive term.
    tr_pi = pi_t.sum(axis=0) + 1e-8                                  # (k,)
    scale_c = (p / (tr_pi * eps))[:, None, None]                     # (k, 1, 1)
    _, logdet_c = jnp.linalg.slogdet(eye[None] + scale_c * gram_cls)
    compress_loss = jnp.sum(tr_pi * logdet_c / (2.0 * m))

    total_loss = -discrimn_loss + gamma * compress_loss
    return total_loss, (discrimn_loss, compress_loss)


def maximal_coding_rate_reduction_ref(x, y, num_classes=None, eps=0.01, gamma=1.0):
    """Pure-JAX reference mirroring the PyTorch module."""
    m, p = x.shape
    w = x.T                                                          # (p, m)
    if y.ndim == 1:
        k = num_classes if num_classes is not None else int(y.max()) + 1
        pi = jax.nn.one_hot(y, k, dtype=jnp.float32).T.reshape(k, 1, m)
    else:
        k = y.shape[1]
        pi = y.astype(jnp.float32).T.reshape(k, 1, m)

    eye = jnp.eye(p, dtype=jnp.float32)
    scalar = p / (m * eps)
    _, logdet = jnp.linalg.slogdet(eye + scalar * (w @ w.T))
    discrimn = logdet / 2.0

    tr_pi = pi.sum(2) + 1e-8                                         # (k, 1)
    scale = (p / (tr_pi * eps)).reshape(k, 1, 1)
    wk = w[None] * pi                                                # (k, p, m)
    _, logdets = jnp.linalg.slogdet(eye[None] + scale * (wk @ jnp.swapaxes(w[None], 1, 2)))
    compress = jnp.sum(tr_pi.squeeze() * logdets / (2.0 * m))

    total = -discrimn + gamma * compress
    return total, (discrimn, compress)


def _check(x, y, k):
    tot, (d, c) = maximal_coding_rate_reduction(x, y, num_classes=k)
    tot = jax.block_until_ready(tot)
    tot_r, (d_r, c_r) = maximal_coding_rate_reduction_ref(x, y, num_classes=k)
    assert jnp.allclose(d, d_r, rtol=1e-3, atol=1e-3), (d, d_r)
    assert jnp.allclose(c, c_r, rtol=1e-3, atol=1e-3), (c, c_r)
    assert jnp.allclose(tot, tot_r, rtol=1e-3, atol=1e-3), (tot, tot_r)


if __name__ == "__main__":
    key = jax.random.PRNGKey(0)
    kx, ky, kx2, ky2, kw = jax.random.split(key, 5)

    # Case 1: one-hot labels, m divisible by everything.
    m, p, k = 64, 128, 4
    x = jax.random.normal(kx, (m, p), dtype=jnp.float32)
    x = x / jnp.linalg.norm(x, axis=1, keepdims=True)                # unit-norm features
    y = jax.random.randint(ky, (m,), 0, k)
    _check(x, y, k)

    # Case 2: awkward m (exercises padding + the 2-way partition split).
    m2 = 200
    x2 = jax.random.normal(kx2, (m2, p), dtype=jnp.float32)
    x2 = x2 / jnp.linalg.norm(x2, axis=1, keepdims=True)
    y2 = jax.random.randint(ky2, (m2,), 0, k)
    _check(x2, y2, k)

    # Case 3: soft membership matrix (keeps the explicit all-ones total-Gram column).
    soft = jax.nn.softmax(jax.random.normal(kw, (m, k), dtype=jnp.float32), axis=-1)
    _check(x, soft, k)

    print("KERNEL_OK")
</pallas_src>

<mosaic_0001>
module attributes {stable_mosaic.version = 11 : i64} {
  func.func @_weighted_gram_kernel(%arg0: i32, %arg1: i32, %arg2: memref<32x128xf32, #tpu.memory_space<vmem>>, %arg3: memref<32x4xf32, #tpu.memory_space<vmem>>, %arg4: memref<1x128x512xf32, #tpu.memory_space<vmem>>) attributes {dimension_semantics = [#tpu.dimension_semantics<parallel>, #tpu.dimension_semantics<arbitrary>], iteration_bounds = array<i64: 2, 1>, scalar_prefetch = 0 : i64, scratch_operands = 0 : i64, tpu.core_type = #tpu.core_type<tc>, window_params = [{transform_indices = @transform_0, window_bounds = array<i64: 32, 128>}, {transform_indices = @transform_1, window_bounds = array<i64: 32, 4>}, {transform_indices = @transform_2, window_bounds = array<i64: 1, 128, 512>}]} {
    %c0_i32 = arith.constant 0 : i32
    %0 = arith.cmpi eq, %arg1, %c0_i32 : i32
    %1 = arith.extui %0 : i1 to i32
    %c0_i32_0 = arith.constant 0 : i32
    %2 = arith.cmpi ne, %1, %c0_i32_0 : i32
    scf.if %2 {
      %cst_10 = arith.constant 0.000000e+00 : f32
      %25 = vector.broadcast %cst_10 : f32 to vector<1x128x512xf32>
      %c0_11 = arith.constant 0 : index
      %c0_12 = arith.constant 0 : index
      %c0_13 = arith.constant 0 : index
      %26 = vector.load %arg4[%c0_11, %c0_12, %c0_13] : memref<1x128x512xf32, #tpu.memory_space<vmem>>, vector<1x128x512xf32>
      tpu.vector_store %arg4[%c0_11, %c0_12, %c0_13], %25 {strides = array<i32>} : memref<1x128x512xf32, #tpu.memory_space<vmem>>, vector<1x128x512xf32>,
    } else {
    }
    %c0 = arith.constant 0 : index
    %c0_1 = arith.constant 0 : index
    %3 = vector.load %arg2[%c0, %c0_1] : memref<32x128xf32, #tpu.memory_space<vmem>>, vector<32x128xf32>
    %c0_2 = arith.constant 0 : index
    %c0_3 = arith.constant 0 : index
    %4 = vector.load %arg3[%c0_2, %c0_3] : memref<32x4xf32, #tpu.memory_space<vmem>>, vector<32x4xf32>
    %5 = vector.extract_strided_slice %4 {offsets = [0, 0], sizes = [32, 1], strides = [1, 1]} : vector<32x4xf32> to vector<32x1xf32>
    %6 = vector.broadcast %5 : vector<32x1xf32> to vector<32x128xf32>
    %7 = arith.mulf %6, %3 : vector<32x128xf32>
    %8 = vector.extract_strided_slice %4 {offsets = [0, 1], sizes = [32, 1], strides = [1, 1]} : vector<32x4xf32> to vector<32x1xf32>
    %9 = vector.broadcast %8 : vector<32x1xf32> to vector<32x128xf32>
    %10 = arith.mulf %9, %3 : vector<32x128xf32>
    %11 = vector.extract_strided_slice %4 {offsets = [0, 2], sizes = [32, 1], strides = [1, 1]} : vector<32x4xf32> to vector<32x1xf32>
    %12 = vector.broadcast %11 : vector<32x1xf32> to vector<32x128xf32>
    %13 = arith.mulf %12, %3 : vector<32x128xf32>
    %14 = vector.extract_strided_slice %4 {offsets = [0, 3], sizes = [32, 1], strides = [1, 1]} : vector<32x4xf32> to vector<32x1xf32>
    %15 = vector.broadcast %14 : vector<32x1xf32> to vector<32x128xf32>
    %16 = arith.mulf %15, %3 : vector<32x128xf32>
    %17 = tpu.concatenate %7, %10, %13, %16 in 1 : vector<32x128xf32>, vector<32x128xf32>, vector<32x128xf32>, vector<32x128xf32> -> vector<32x512xf32>
    %c0_4 = arith.constant 0 : index
    %c0_5 = arith.constant 0 : index
    %c0_6 = arith.constant 0 : index
    %18 = vector.load %arg4[%c0_4, %c0_5, %c0_6] : memref<1x128x512xf32, #tpu.memory_space<vmem>>, vector<1x128x512xf32>
    %19 = vector.shape_cast %18 : vector<1x128x512xf32> to vector<128x512xf32>
    %cst = arith.constant dense<0.000000e+00> : vector<128x512xf32>
    %20 = tpu.matmul %3, %17, %cst {dimension_numbers = #tpu.dot_dimension_numbers<[0], [0], [1], [1], [0, 1, 1, 1], [], []>} : vector<32x128xf32>, vector<32x512xf32>, vector<128x512xf32> -> vector<128x512xf32>
    %21 = arith.addf %19, %20 : vector<128x512xf32>
    %c0_7 = arith.constant 0 : index
    %c0_8 = arith.constant 0 : index
    %c0_9 = arith.constant 0 : index
    %22 = vector.load %arg4[%c0_7, %c0_8, %c0_9] : memref<1x128x512xf32, #tpu.memory_space<vmem>>, vector<1x128x512xf32>
    %23 = vector.shape_cast %22 : vector<1x128x512xf32> to vector<128x512xf32>
    %24 = vector.shape_cast %21 : vector<128x512xf32> to vector<1x128x512xf32>
    tpu.vector_store %arg4[%c0_7, %c0_8, %c0_9], %24 {strides = array<i32>} : memref<1x128x512xf32, #tpu.memory_space<vmem>>, vector<1x128x512xf32>,
    return
  }
  func.func @transform_0(%arg0: i32, %arg1: i32) -> (i32, i32) {
    %c1_i32 = arith.constant 1 : i32
    %0 = arith.muli %arg0, %c1_i32 : i32
    %1 = arith.addi %0, %arg1 : i32
    %c0_i32 = arith.constant 0 : i32
    %c0_i32_0 = arith.constant 0 : i32
    return %1, %c0_i32 : i32, i32
  }
  func.func @transform_1(%arg0: i32, %arg1: i32) -> (i32, i32) {
    %c1_i32 = arith.constant 1 : i32
    %0 = arith.muli %arg0, %c1_i32 : i32
    %1 = arith.addi %0, %arg1 : i32
    %c0_i32 = arith.constant 0 : i32
    %c0_i32_0 = arith.constant 0 : i32
    return %1, %c0_i32 : i32, i32
  }
  func.func @transform_2(%arg0: i32, %arg1: i32) -> (i32, i32, i32) {
    %c0_i32 = arith.constant 0 : i32
    %c0_i32_0 = arith.constant 0 : i32
    %c0_i32_1 = arith.constant 0 : i32
    return %arg0, %c0_i32, %c0_i32_0 : i32, i32, i32
  }
}

</mosaic_0001>

<llo_original>
// kernel: tpu_custom_call.1
$region0: #{tpu_custom_call.1}
  #allocation0 [shape = 'u32[]', space=smem, size = 0x4, offset = 0x4, fixed_abs, tag = 'smem constant byte address 0x4 - core index']
  #allocation1 [shape = 'u32[144,128]{1,0:T(1,128)}', space=vmem, size = 0x12000, scoped, tag = 'internal scratch']
  %s0 = inlined_call_operand.vmem [shape: f32[64,128], index: 0, kind: input, shape index: {}]
  %s1 = inlined_call_operand.vmem [shape: f32[64,4], index: 1, kind: input, shape index: {}]
  %s2 = inlined_call_operand.hbm [shape: f32[2,128,512], index: 2, kind: output, shape index: {}]
  %s3 = sld [smem:[#allocation0]]
  $region45: #{tpu_custom_call.1} parent=0
    _
  %s5 = ssub.s32 1, %s3
  %s6 = scalar_select 0, %s5, %s3
  $region1: #{tpu_custom_call.1} parent=0
    #allocation2 [shape = 'u8[524288]{0}', space=vmem, size = 0x80000, scoped, tag = 'output window, operand 0']
    #allocation3 [shape = 's32[2]{0}', space=sflag, size = 0x8, scoped, tag = 'scoped memory for tpu_custom_call.1']
    %7 = vsyncpa [#allocation3], 0
    %s8 = scalar_lea.sflag [#allocation3], 1
    %9 = vsyncpa %s8, 0
    loop: start=0, step=1, limit=4
    $region2: #{tpu_custom_call.1} parent=1 // loop_pre_header
      _
    $region3: #{tpu_custom_call.1} parent=1 // loop_header
      %s11 = sphi 0, %s15
      %p12 = scmp.ge.s32.totalorder %s11, 4
      %s18 = sphi 0, %s30
      %s19 = sphi 0, %s26
      %s20 = sphi 0, %s18
      %s21 = sphi 0, %s19
      %s22 = sphi 0, %s20
      %s23 = sphi 0, %s21
      %s35 = sphi 0, %s37
      %s38 = sphi 0, %s35
      %s39 = sphi 0, %s38
      %s55 = sphi 0, %s39
      %s63 = sphi 0, %s65
      %s66 = sphi 0, %s63
      %s67 = sphi 0, %s66
      %s83 = sphi 0, %s67
      %s89 = sphi 0, %s91
      %s92 = sphi 0, %s89
      %s93 = sphi 0, %s92
      %s109 = sphi 0, %s93
    $region4: #{tpu_custom_call.1} parent=1 // loop_header_branch
      %14 = sbr.rel (%p12) target = $region8
    $region5: #{tpu_custom_call.1} parent=1 // loop_body
      %s16 = ssub.s32 %s11, 1
      %s17 = ssub.s32 %s11, 2
      %s24 = sadd.s32 1, %s19
      %p25 = scmp.ge.s32.totalorder %s24, 1
      %s26 = scalar_select %p25, 0, %s24
      %s27 = sadd.s32 1, %s18
      %s28 = scalar_select %p25, %s27, %s18
      %p29 = scmp.ge.s32.totalorder %s28, 2
      %s30 = scalar_select %p29, 0, %s28
      %s31 = sadd.s32 %s18, %s19
      %s32 = sadd.s32 %s30, %s26
      %s33 = ssub.s32 %s31, %s32
      %p34 = scmp.eq.s32.totalorder %s33, 0
      %s36 = sadd.s32 %s35, 1
      %s37 = scalar_select %p34, %s35, %s36
      %p40 = pneg %p34
      %p41 = scmp.eq.s32.totalorder %s11, 1
      %p42 = por %p40, %p41
      %p43 = scmp.ne.s32.totalorder %s35, %s38
      %p44 = scmp.eq.s32.totalorder %s11, 0
      %p45 = por %p43, %p44
      %p46 = scmp.ne.s32.totalorder %s35, %s38
      %p47 = scmp.eq.s32.totalorder %s16, 1
      %p48 = por %p46, %p47
      %p49 = scmp.ne.s32.totalorder %s38, %s39
      %p50 = scmp.eq.s32.totalorder %s16, 0
      %p51 = por %p49, %p50
      %p52 = scmp.ne.s32.totalorder %s38, %s39
      %p53 = scmp.eq.s32.totalorder %s17, 1
      %p54 = por %p52, %p53
      %p56 = scmp.ne.s32.totalorder %s39, %s55
      %p57 = scmp.eq.s32.totalorder %s17, 0
      %p58 = por %p56, %p57
      %s59 = sadd.s32 %s18, %s19
      %s60 = sadd.s32 %s30, %s26
      %s61 = ssub.s32 %s59, %s60
      %p62 = scmp.eq.s32.totalorder %s61, 0
      %s64 = sadd.s32 %s63, 1
      %s65 = scalar_select %p62, %s63, %s64
      %p68 = pneg %p62
      %p69 = scmp.eq.s32.totalorder %s11, 1
      %p70 = por %p68, %p69
      %p71 = scmp.ne.s32.totalorder %s63, %s66
      %p72 = scmp.eq.s32.totalorder %s11, 0
      %p73 = por %p71, %p72
      %p74 = scmp.ne.s32.totalorder %s63, %s66
      %p75 = scmp.eq.s32.totalorder %s16, 1
      %p76 = por %p74, %p75
      %p77 = scmp.ne.s32.totalorder %s66, %s67
      %p78 = scmp.eq.s32.totalorder %s16, 0
      %p79 = por %p77, %p78
      %p80 = scmp.ne.s32.totalorder %s66, %s67
      %p81 = scmp.eq.s32.totalorder %s17, 1
      %p82 = por %p80, %p81
      %p84 = scmp.ne.s32.totalorder %s67, %s83
      %p85 = scmp.eq.s32.totalorder %s17, 0
      %p86 = por %p84, %p85
      %s87 = ssub.s32 %s18, %s30
      %p88 = scmp.eq.s32.totalorder %s87, 0
      %s90 = sadd.s32 %s89, 1
      %s91 = scalar_select %p88, %s89, %s90
      %p94 = pneg %p88
      %p95 = scmp.eq.s32.totalorder %s11, 1
      %p96 = por %p94, %p95
      %p97 = scmp.ne.s32.totalorder %s89, %s92
      %p98 = scmp.eq.s32.totalorder %s11, 0
      %p99 = por %p97, %p98
      %p100 = scmp.ne.s32.totalorder %s89, %s92
      %p101 = scmp.eq.s32.totalorder %s16, 1
      %p102 = por %p100, %p101
      %p103 = scmp.ne.s32.totalorder %s92, %s93
      %p104 = scmp.eq.s32.totalorder %s16, 0
      %p105 = por %p103, %p104
      %p106 = scmp.ne.s32.totalorder %s92, %s93
      %p107 = scmp.eq.s32.totalorder %s17, 1
      %p108 = por %p106, %p107
      %p110 = scmp.ne.s32.totalorder %s93, %s109
      %p111 = scmp.eq.s32.totalorder %s17, 0
      %p112 = por %p110, %p111
      %p113 = scmp.le.s32.totalorder 1, %s11
      %p114 = scmp.lt.s32.totalorder %s11, 3
      %p115 = pnand %p113, %p114
      %p116 = pneg %p115
      // Predicated region
      $region9: #{tpu_custom_call.1} parent=5 // pred_check
        _
      $region10: #{tpu_custom_call.1} parent=5 // pred_check_branch
        %118 = sbr.rel (%p115) target = $region12
      $region11: #{tpu_custom_call.1} parent=5 // pred_region
        %s119 = ssub.s32 %s11, 1
      $region12: #{tpu_custom_call.1} parent=5 // pred_fallthru
        _
      %p120 = scmp.lt.s32.totalorder %s11, 2
      // Predicated region
      $region13: #{tpu_custom_call.1} parent=5 // pred_check
        %p121 = pneg %p120
      $region14: #{tpu_custom_call.1} parent=5 // pred_check_branch
        %123 = sbr.rel (%p121) target = $region16
      $region15: #{tpu_custom_call.1} parent=5 // pred_region
        // Predicated region
        $region17: #{tpu_custom_call.1} parent=15 // pred_check
          %p124 = pneg %p45
        $region18: #{tpu_custom_call.1} parent=15 // pred_check_branch
          %126 = sbr.rel (%p124) target = $region20
        $region19: #{tpu_custom_call.1} parent=15 // pred_region
          %s127 = sadd.s32 %s18, %s19
          %s128 = smul.u32 4, %s127
          %p129 = scmp.lt.s32.totalorder %s128, 7
          %s130 = scalar_select %p129, %s128, 7
          %s131 = smul.addr %s130, 8
          %s132 = scalar_lea.vmem %s0, %s131
          %s133 = sadd.s32 %s18, %s19
          %s134 = smul.u32 4, %s133
        $region20: #{tpu_custom_call.1} parent=15 // pred_fallthru
          _
        // Predicated region
        $region21: #{tpu_custom_call.1} parent=15 // pred_check
          %p135 = pneg %p73
        $region22: #{tpu_custom_call.1} parent=15 // pred_check_branch
          %137 = sbr.rel (%p135) target = $region24
        $region23: #{tpu_custom_call.1} parent=15 // pred_region
          %s138 = sadd.s32 %s18, %s19
          %s139 = smul.u32 4, %s138
          %p140 = scmp.lt.s32.totalorder %s139, 7
          %s141 = scalar_select %p140, %s139, 7
          %s142 = smul.addr %s141, 8
          %s143 = scalar_lea.vmem %s1, %s142
          %s144 = sadd.s32 %s18, %s19
          %s145 = smul.u32 4, %s144
        $region24: #{tpu_custom_call.1} parent=15 // pred_fallthru
          _
      $region16: #{tpu_custom_call.1} parent=5 // pred_fallthru
        _
      %p146 = scmp.le.s32.totalorder 1, %s11
      %p147 = scmp.lt.s32.totalorder %s11, 3
      %p148 = pnand %p146, %p147
      %p149 = pneg %p148
      // Predicated region
      $region25: #{tpu_custom_call.1} parent=5 // pred_check
        _
      $region26: #{tpu_custom_call.1} parent=5 // pred_check_branch
        %151 = sbr.rel (%p148) target = $region28
      $region27: #{tpu_custom_call.1} parent=5 // pred_region
        %s152 = ssub.s32 %s11, 1
        %s153 = sadd.s32 %s20, %s21
        %s154 = smul.u32 4, %s153
        %p155 = scmp.lt.s32.totalorder %s154, 7
        %s156 = scalar_select %p155, %s154, 7
        %s157 = smul.addr %s156, 8
        %s158 = scalar_lea.vmem %s0, %s157
        %p159 = pneg %p51
        %p160 = pneg %p48
        %s161 = sadd.s32 %s20, %s21
        %s162 = smul.u32 4, %s161
        %p163 = scmp.lt.s32.totalorder %s162, 7
        %s164 = scalar_select %p163, %s162, 7
        %s165 = smul.addr %s164, 8
        %s166 = scalar_lea.vmem %s1, %s165
        %p167 = pneg %p79
        %p168 = pneg %p76
        %p169 = pneg %p105
        %p170 = pneg %p102
        %s171 = sand.u32 %s92, 1
        %s172 = scalar_lea.sflag [#allocation3], %s171
        %s173 = sand.u32 %s92, 1
        %s174 = smul.addr %s173, 512
        %s175 = scalar_lea.vmem [#allocation2], %s174
        %s176 = sadd.s32 %s20, %s21
        %s177 = smul.u32 4, %s176
        %p178 = scmp.lt.s32.totalorder %s177, 7
        %s179 = scalar_select %p178, %s177, 7
        %s180 = smul.addr %s179, 8
        %s181 = scalar_lea.vmem %s0, %s180
        %s182 = sadd.s32 %s20, %s21
        %s183 = smul.u32 4, %s182
        %s184 = sadd.s32 %s20, %s21
        %s185 = smul.u32 4, %s184
        %p186 = scmp.lt.s32.totalorder %s185, 7
        %s187 = scalar_select %p186, %s185, 7
        %s188 = smul.addr %s187, 8
        %s189 = scalar_lea.vmem %s1, %s188
        %s190 = sadd.s32 %s20, %s21
        %s191 = smul.u32 4, %s190
        %p192 = scmp.eq.s32.totalorder %s21, 0
        // Predicated region
        $region29: #{tpu_custom_call.1} parent=27 // pred_check
          %p193 = pneg %p192
        $region30: #{tpu_custom_call.1} parent=27 // pred_check_branch
          %195 = sbr.rel (%p193) target = $region32
        $region31: #{tpu_custom_call.1} parent=27 // pred_region
          %196 = vst [vmem:[%s175] sm:$0xff] 0.0
          %197 = vst [vmem:[%s175 + $0x8] sm:$0xff] 0.0
          %198 = vst [vmem:[%s175 + $0x10] sm:$0xff] 0.0
          %199 = vst [vmem:[%s175 + $0x18] sm:$0xff] 0.0
          %200 = vst [vmem:[%s175 + $0x20] sm:$0xff] 0.0
          %201 = vst [vmem:[%s175 + $0x28] sm:$0xff] 0.0
          %202 = vst [vmem:[%s175 + $0x30] sm:$0xff] 0.0
          %203 = vst [vmem:[%s175 + $0x38] sm:$0xff] 0.0
          %204 = vst [vmem:[%s175 + $0x40] sm:$0xff] 0.0
          %205 = vst [vmem:[%s175 + $0x48] sm:$0xff] 0.0
          %206 = vst [vmem:[%s175 + $0x50] sm:$0xff] 0.0
          %207 = vst [vmem:[%s175 + $0x58] sm:$0xff] 0.0
          %208 = vst [vmem:[%s175 + $0x60] sm:$0xff] 0.0
          %209 = vst [vmem:[%s175 + $0x68] sm:$0xff] 0.0
          %210 = vst [vmem:[%s175 + $0x70] sm:$0xff] 0.0
          %211 = vst [vmem:[%s175 + $0x78] sm:$0xff] 0.0
          %212 = vst [vmem:[%s175 + $0x80] sm:$0xff] 0.0
          %213 = vst [vmem:[%s175 + $0x88] sm:$0xff] 0.0
          %214 = vst [vmem:[%s175 + $0x90] sm:$0xff] 0.0
          %215 = vst [vmem:[%s175 + $0x98] sm:$0xff] 0.0
          %216 = vst [vmem:[%s175 + $0xa0] sm:$0xff] 0.0
          %217 = vst [vmem:[%s175 + $0xa8] sm:$0xff] 0.0
          %218 = vst [vmem:[%s175 + $0xb0] sm:$0xff] 0.0
          %219 = vst [vmem:[%s175 + $0xb8] sm:$0xff] 0.0
          %220 = vst [vmem:[%s175 + $0xc0] sm:$0xff] 0.0
          %221 = vst [vmem:[%s175 + $0xc8] sm:$0xff] 0.0
          %222 = vst [vmem:[%s175 + $0xd0] sm:$0xff] 0.0
          %223 = vst [vmem:[%s175 + $0xd8] sm:$0xff] 0.0
          %224 = vst [vmem:[%s175 + $0xe0] sm:$0xff] 0.0
          %225 = vst [vmem:[%s175 + $0xe8] sm:$0xff] 0.0
          %226 = vst [vmem:[%s175 + $0xf0] sm:$0xff] 0.0
          %227 = vst [vmem:[%s175 + $0xf8] sm:$0xff] 0.0
          %228 = vst [vmem:[%s175 + $0x100] sm:$0xff] 0.0
          %229 = vst [vmem:[%s175 + $0x108] sm:$0xff] 0.0
          %230 = vst [vmem:[%s175 + $0x110] sm:$0xff] 0.0
          %231 = vst [vmem:[%s175 + $0x118] sm:$0xff] 0.0
          %232 = vst [vmem:[%s175 + $0x120] sm:$0xff] 0.0
          %233 = vst [vmem:[%s175 + $0x128] sm:$0xff] 0.0
          %234 = vst [vmem:[%s175 + $0x130] sm:$0xff] 0.0
          %235 = vst [vmem:[%s175 + $0x138] sm:$0xff] 0.0
          %236 = vst [vmem:[%s175 + $0x140] sm:$0xff] 0.0
          %237 = vst [vmem:[%s175 + $0x148] sm:$0xff] 0.0
          %238 = vst [vmem:[%s175 + $0x150] sm:$0xff] 0.0
          %239 = vst [vmem:[%s175 + $0x158] sm:$0xff] 0.0
          %240 = vst [vmem:[%s175 + $0x160] sm:$0xff] 0.0
          %241 = vst [vmem:[%s175 + $0x168] sm:$0xff] 0.0
          %242 = vst [vmem:[%s175 + $0x170] sm:$0xff] 0.0
          %243 = vst [vmem:[%s175 + $0x178] sm:$0xff] 0.0
          %244 = vst [vmem:[%s175 + $0x180] sm:$0xff] 0.0
          %245 = vst [vmem:[%s175 + $0x188] sm:$0xff] 0.0
          %246 = vst [vmem:[%s175 + $0x190] sm:$0xff] 0.0
          %247 = vst [vmem:[%s175 + $0x198] sm:$0xff] 0.0
          %248 = vst [vmem:[%s175 + $0x1a0] sm:$0xff] 0.0
          %249 = vst [vmem:[%s175 + $0x1a8] sm:$0xff] 0.0
          %250 = vst [vmem:[%s175 + $0x1b0] sm:$0xff] 0.0
          %251 = vst [vmem:[%s175 + $0x1b8] sm:$0xff] 0.0
          %252 = vst [vmem:[%s175 + $0x1c0] sm:$0xff] 0.0
          %253 = vst [vmem:[%s175 + $0x1c8] sm:$0xff] 0.0
          %254 = vst [vmem:[%s175 + $0x1d0] sm:$0xff] 0.0
          %255 = vst [vmem:[%s175 + $0x1d8] sm:$0xff] 0.0
          %256 = vst [vmem:[%s175 + $0x1e0] sm:$0xff] 0.0
          %257 = vst [vmem:[%s175 + $0x1e8] sm:$0xff] 0.0
          %258 = vst [vmem:[%s175 + $0x1f0] sm:$0xff] 0.0
          %259 = vst [vmem:[%s175 + $0x1f8] sm:$0xff] 0.0
        $region32: #{tpu_custom_call.1} parent=27 // pred_fallthru
          _
        %v260 = vld [vmem:[%s181] sm:$0xff]
        %v261 = vld [vmem:[%s181 + $0x8] sm:$0xff]
        %v262 = vld [vmem:[%s181 + $0x10] sm:$0xff]
        %v263 = vld [vmem:[%s181 + $0x18] sm:$0xff]
        %v264 = vld [vmem:[%s189] sm:$0xff]
        %v265 = vld [vmem:[%s189 + $0x8] sm:$0xff]
        %v266 = vld [vmem:[%s189 + $0x10] sm:$0xff]
        %v267 = vld [vmem:[%s189 + $0x18] sm:$0xff]
        %269 = vset.pattern.permute.xlu0 0
        %270 = vperm.xlu0 %269, %v264
        %v271 = vpop.permute.xlu0 %270
        %274 = vset.pattern.permute.xlu0 0
        %275 = vperm.xlu0 %274, %v265
        %v276 = vpop.permute.xlu0 %275
        %279 = vset.pattern.permute.xlu0 0
        %280 = vperm.xlu0 %279, %v266
        %v281 = vpop.permute.xlu0 %280
        %284 = vset.pattern.permute.xlu0 0
        %285 = vperm.xlu0 %284, %v267
        %v286 = vpop.permute.xlu0 %285
        %v288 = vmul.f32 %v271, %v260
        %v289 = vmul.f32 %v276, %v261
        %v290 = vmul.f32 %v281, %v262
        %v291 = vmul.f32 %v286, %v263
        %292 = vset.pattern.permute.xlu0 1
        %293 = vperm.xlu0 %292, %v264
        %v294 = vpop.permute.xlu0 %293
        %296 = vset.pattern.permute.xlu0 1
        %297 = vperm.xlu0 %296, %v265
        %v298 = vpop.permute.xlu0 %297
        %300 = vset.pattern.permute.xlu0 1
        %301 = vperm.xlu0 %300, %v266
        %v302 = vpop.permute.xlu0 %301
        %304 = vset.pattern.permute.xlu0 1
        %305 = vperm.xlu0 %304, %v267
        %v306 = vpop.permute.xlu0 %305
        %v308 = vmul.f32 %v294, %v260
        %v309 = vmul.f32 %v298, %v261
        %v310 = vmul.f32 %v302, %v262
        %v311 = vmul.f32 %v306, %v263
        %312 = vset.pattern.permute.xlu0 2
        %313 = vperm.xlu0 %312, %v264
        %v314 = vpop.permute.xlu0 %313
        %316 = vset.pattern.permute.xlu0 2
        %317 = vperm.xlu0 %316, %v265
        %v318 = vpop.permute.xlu0 %317
        %320 = vset.pattern.permute.xlu0 2
        %321 = vperm.xlu0 %320, %v266
        %v322 = vpop.permute.xlu0 %321
        %324 = vset.pattern.permute.xlu0 2
        %325 = vperm.xlu0 %324, %v267
        %v326 = vpop.permute.xlu0 %325
        %v328 = vmul.f32 %v314, %v260
        %v329 = vmul.f32 %v318, %v261
        %v330 = vmul.f32 %v322, %v262
        %v331 = vmul.f32 %v326, %v263
        %332 = vset.pattern.permute.xlu0 3
        %333 = vperm.xlu0 %332, %v264
        %v334 = vpop.permute.xlu0 %333
        %336 = vset.pattern.permute.xlu0 3
        %337 = vperm.xlu0 %336, %v265
        %v338 = vpop.permute.xlu0 %337
        %340 = vset.pattern.permute.xlu0 3
        %341 = vperm.xlu0 %340, %v266
        %v342 = vpop.permute.xlu0 %341
        %344 = vset.pattern.permute.xlu0 3
        %345 = vperm.xlu0 %344, %v267
        %v346 = vpop.permute.xlu0 %345
        %v348 = vmul.f32 %v334, %v260
        %v349 = vmul.f32 %v338, %v261
        %v350 = vmul.f32 %v342, %v262
        %v351 = vmul.f32 %v346, %v263
        %v352 = vld [vmem:[%s175] sm:$0xff]
        %v353 = vld [vmem:[%s175 + $0x8] sm:$0xff]
        %v354 = vld [vmem:[%s175 + $0x10] sm:$0xff]
        %v355 = vld [vmem:[%s175 + $0x18] sm:$0xff]
        %v356 = vld [vmem:[%s175 + $0x20] sm:$0xff]
        %v357 = vld [vmem:[%s175 + $0x28] sm:$0xff]
        %v358 = vld [vmem:[%s175 + $0x30] sm:$0xff]
        %v359 = vld [vmem:[%s175 + $0x38] sm:$0xff]
        %v360 = vld [vmem:[%s175 + $0x40] sm:$0xff]
        %v361 = vld [vmem:[%s175 + $0x48] sm:$0xff]
        %v362 = vld [vmem:[%s175 + $0x50] sm:$0xff]
        %v363 = vld [vmem:[%s175 + $0x58] sm:$0xff]
        %v364 = vld [vmem:[%s175 + $0x60] sm:$0xff]
        %v365 = vld [vmem:[%s175 + $0x68] sm:$0xff]
        %v366 = vld [vmem:[%s175 + $0x70] sm:$0xff]
        %v367 = vld [vmem:[%s175 + $0x78] sm:$0xff]
        %v368 = vld [vmem:[%s175 + $0x80] sm:$0xff]
        %v369 = vld [vmem:[%s175 + $0x88] sm:$0xff]
        %v370 = vld [vmem:[%s175 + $0x90] sm:$0xff]
        %v371 = vld [vmem:[%s175 + $0x98] sm:$0xff]
        %v372 = vld [vmem:[%s175 + $0xa0] sm:$0xff]
        %v373 = vld [vmem:[%s175 + $0xa8] sm:$0xff]
        %v374 = vld [vmem:[%s175 + $0xb0] sm:$0xff]
        %v375 = vld [vmem:[%s175 + $0xb8] sm:$0xff]
        %v376 = vld [vmem:[%s175 + $0xc0] sm:$0xff]
        %v377 = vld [vmem:[%s175 + $0xc8] sm:$0xff]
        %v378 = vld [vmem:[%s175 + $0xd0] sm:$0xff]
        %v379 = vld [vmem:[%s175 + $0xd8] sm:$0xff]
        %v380 = vld [vmem:[%s175 + $0xe0] sm:$0xff]
        %v381 = vld [vmem:[%s175 + $0xe8] sm:$0xff]
        %v382 = vld [vmem:[%s175 + $0xf0] sm:$0xff]
        %v383 = vld [vmem:[%s175 + $0xf8] sm:$0xff]
        %v384 = vld [vmem:[%s175 + $0x100] sm:$0xff]
        %v385 = vld [vmem:[%s175 + $0x108] sm:$0xff]
        %v386 = vld [vmem:[%s175 + $0x110] sm:$0xff]
        %v387 = vld [vmem:[%s175 + $0x118] sm:$0xff]
        %v388 = vld [vmem:[%s175 + $0x120] sm:$0xff]
        %v389 = vld [vmem:[%s175 + $0x128] sm:$0xff]
        %v390 = vld [vmem:[%s175 + $0x130] sm:$0xff]
        %v391 = vld [vmem:[%s175 + $0x138] sm:$0xff]
        %v392 = vld [vmem:[%s175 + $0x140] sm:$0xff]
        %v393 = vld [vmem:[%s175 + $0x148] sm:$0xff]
        %v394 = vld [vmem:[%s175 + $0x150] sm:$0xff]
        %v395 = vld [vmem:[%s175 + $0x158] sm:$0xff]
        %v396 = vld [vmem:[%s175 + $0x160] sm:$0xff]
        %v397 = vld [vmem:[%s175 + $0x168] sm:$0xff]
        %v398 = vld [vmem:[%s175 + $0x170] sm:$0xff]
        %v399 = vld [vmem:[%s175 + $0x178] sm:$0xff]
        %v400 = vld [vmem:[%s175 + $0x180] sm:$0xff]
        %v401 = vld [vmem:[%s175 + $0x188] sm:$0xff]
        %v402 = vld [vmem:[%s175 + $0x190] sm:$0xff]
        %v403 = vld [vmem:[%s175 + $0x198] sm:$0xff]
        %v404 = vld [vmem:[%s175 + $0x1a0] sm:$0xff]
        %v405 = vld [vmem:[%s175 + $0x1a8] sm:$0xff]
        %v406 = vld [vmem:[%s175 + $0x1b0] sm:$0xff]
        %v407 = vld [vmem:[%s175 + $0x1b8] sm:$0xff]
        %v408 = vld [vmem:[%s175 + $0x1c0] sm:$0xff]
        %v409 = vld [vmem:[%s175 + $0x1c8] sm:$0xff]
        %v410 = vld [vmem:[%s175 + $0x1d0] sm:$0xff]
        %v411 = vld [vmem:[%s175 + $0x1d8] sm:$0xff]
        %v412 = vld [vmem:[%s175 + $0x1e0] sm:$0xff]
        %v413 = vld [vmem:[%s175 + $0x1e8] sm:$0xff]
        %v414 = vld [vmem:[%s175 + $0x1f0] sm:$0xff]
        %v415 = vld [vmem:[%s175 + $0x1f8] sm:$0xff]
        %416 = vxpose.xlu0.b32.start [1/16] %v260, 128
        %417 = vxpose.xlu0.b32.cont [2/16] %v261, 128
        %418 = vxpose.xlu0.b32.cont [3/16] %v262, 128
        %419 = vxpose.xlu0.b32.cont [4/16] %v263, 128
        %420 = vxpose.xlu0.b32.cont [5/16] 0.0, 128
        %421 = vxpose.xlu0.b32.cont [6/16] 0.0, 128
        %422 = vxpose.xlu0.b32.cont [7/16] 0.0, 128
        %423 = vxpose.xlu0.b32.cont [8/16] 0.0, 128
        %424 = vxpose.xlu0.b32.cont [9/16] 0.0, 128
        %425 = vxpose.xlu0.b32.cont [10/16] 0.0, 128
        %426 = vxpose.xlu0.b32.cont [11/16] 0.0, 128
        %427 = vxpose.xlu0.b32.cont [12/16] 0.0, 128
        %428 = vxpose.xlu0.b32.cont [13/16] 0.0, 128
        %429 = vxpose.xlu0.b32.cont [14/16] 0.0, 128
        %430 = vxpose.xlu0.b32.cont [15/16] 0.0, 128
        %431 = vxpose.xlu0.b32.end [16/16] 0.0, 128
        %v432 = vpop.trf.xlu0
        %v433 = vpop.trf.xlu0
        %v434 = vpop.trf.xlu0
        %v435 = vpop.trf.xlu0
        %v436 = vpop.trf.xlu0
        %v437 = vpop.trf.xlu0
        %v438 = vpop.trf.xlu0
        %v439 = vpop.trf.xlu0
        %v440 = vpop.trf.xlu0
        %v441 = vpop.trf.xlu0
        %v442 = vpop.trf.xlu0
        %v443 = vpop.trf.xlu0
        %v444 = vpop.trf.xlu0
        %v445 = vpop.trf.xlu0
        %v446 = vpop.trf.xlu0
        %v447 = vpop.trf.xlu0
        %vm448 = vcmask 261120
        %v450 = vsel %vm448, %v432, 0
        %v453 = vsel %vm448, %v433, 0
        %v456 = vsel %vm448, %v434, 0
        %v459 = vsel %vm448, %v435, 0
        %v462 = vsel %vm448, %v436, 0
        %v465 = vsel %vm448, %v437, 0
        %v468 = vsel %vm448, %v438, 0
        %v471 = vsel %vm448, %v439, 0
        %v474 = vsel %vm448, %v440, 0
        %v477 = vsel %vm448, %v441, 0
        %v480 = vsel %vm448, %v442, 0
        %v483 = vsel %vm448, %v443, 0
        %v486 = vsel %vm448, %v444, 0
        %v489 = vsel %vm448, %v445, 0
        %v492 = vsel %vm448, %v446, 0
        %v495 = vsel %vm448, %v447, 0
        %497 = vmatprep.subr.mxu0 0.0
        %498 = vmatpush1.msra.mxu0 0.0
        %499 = vmatprep.subr.mxu0 0.0
        %500 = vmatpush1.msra.mxu0 0.0
        %501 = vmatprep.subr.mxu0 0.0
        %502 = vmatpush1.msra.mxu0 0.0
        %503 = vmatprep.subr.mxu0 0.0
        %504 = vmatpush1.msra.mxu0 0.0
        %505 = vmatprep.subr.mxu0 0.0
        %506 = vmatpush1.msra.mxu0 0.0
        %507 = vmatprep.subr.mxu0 0.0
        %508 = vmatpush1.msra.mxu0 0.0
        %509 = vmatprep.subr.mxu0 0.0
        %510 = vmatpush1.msra.mxu0 0.0
        %511 = vmatprep.subr.mxu0 0.0
        %512 = vmatpush1.msra.mxu0 0.0
        %513 = vmatprep.subr.mxu0 0.0
        %514 = vmatpush1.msra.mxu0 0.0
        %515 = vmatprep.subr.mxu0 0.0
        %516 = vmatpush1.msra.mxu0 0.0
        %517 = vmatprep.subr.mxu0 0.0
        %518 = vmatpush1.msra.mxu0 0.0
        %519 = vmatprep.subr.mxu0 0.0
        %520 = vmatpush1.msra.mxu0 0.0
        %521 = vmatprep.subr.mxu0 %v311
        %522 = vmatpush1.msra.mxu0 %v291
        %523 = vmatprep.subr.mxu0 %v310
        %524 = vmatpush1.msra.mxu0 %v290
        %525 = vmatprep.subr.mxu0 %v309
        %526 = vmatpush1.msra.mxu0 %v289
        %527 = vmatprep.subr.mxu0 %v308
        %528 = vmatpush1.msra.mxu0 %v288
        %529 = vmatprep.subr.mxu0 0.0
        %530 = vmatpush2.msra.mxu0 0.0
        %531 = vmatprep.subr.mxu0 0.0
        %532 = vmatpush2.msra.mxu0 0.0
        %533 = vmatprep.subr.mxu0 0.0
        %534 = vmatpush2.msra.mxu0 0.0
        %535 = vmatprep.subr.mxu0 0.0
        %536 = vmatpush2.msra.mxu0 0.0
        %537 = vmatprep.subr.mxu0 0.0
        %538 = vmatpush2.msra.mxu0 0.0
        %539 = vmatprep.subr.mxu0 0.0
        %540 = vmatpush2.msra.mxu0 0.0
        %541 = vmatprep.subr.mxu0 0.0
        %542 = vmatpush2.msra.mxu0 0.0
        %543 = vmatprep.subr.mxu0 0.0
        %544 = vmatpush2.msra.mxu0 0.0
        %545 = vmatprep.subr.mxu0 0.0
        %546 = vmatpush2.msra.mxu0 0.0
        %547 = vmatprep.subr.mxu0 0.0
        %548 = vmatpush2.msra.mxu0 0.0
        %549 = vmatprep.subr.mxu0 0.0
        %550 = vmatpush2.msra.mxu0 0.0
        %551 = vmatprep.subr.mxu0 0.0
        %552 = vmatpush2.msra.mxu0 0.0
        %553 = vmatprep.subr.mxu0 0.0
        %554 = vmatpush2.msra.mxu0 0.0
        %555 = vmatprep.subr.mxu0 0.0
        %556 = vmatpush2.msra.mxu0 0.0
        %557 = vmatprep.subr.mxu0 0.0
        %558 = vmatpush2.msra.mxu0 0.0
        %559 = vmatprep.subr.mxu0 0.0
        %560 = vmatpush2.msra.mxu0 0.0
        %561 = vmatprep.mubr.f32.mxu0 0.0
        %562 = vmatmul.mubr.f32.gmra.mxu0 %v450
        %v563 = vpop.f32.mrf.mxu0
        %v564 = vadd.f32 0.0, %v563
        %v565 = vpop.f32.mrf.mxu0
        %v566 = vadd.f32 0.0, %v565
        %567 = vmatprep.mubr.f32.mxu0 0.0
        %568 = vmatmul.mubr.f32.gmra.mxu0 %v453
        %v569 = vpop.f32.mrf.mxu0
        %v570 = vadd.f32 0.0, %v569
        %v571 = vpop.f32.mrf.mxu0
        %v572 = vadd.f32 0.0, %v571
        %573 = vmatprep.mubr.f32.mxu0 0.0
        %574 = vmatmul.mubr.f32.gmra.mxu0 %v456
        %v575 = vpop.f32.mrf.mxu0
        %v576 = vadd.f32 0.0, %v575
        %v577 = vpop.f32.mrf.mxu0
        %v578 = vadd.f32 0.0, %v577
        %579 = vmatprep.mubr.f32.mxu0 0.0
        %580 = vmatmul.mubr.f32.gmra.mxu0 %v459
        %v581 = vpop.f32.mrf.mxu0
        %v582 = vadd.f32 0.0, %v581
        %v583 = vpop.f32.mrf.mxu0
        %v584 = vadd.f32 0.0, %v583
        %585 = vmatprep.mubr.f32.mxu0 0.0
        %586 = vmatmul.mubr.f32.gmra.mxu0 %v462
        %v587 = vpop.f32.mrf.mxu0
        %v588 = vadd.f32 0.0, %v587
        %v589 = vpop.f32.mrf.mxu0
        %v590 = vadd.f32 0.0, %v589
        %591 = vmatprep.mubr.f32.mxu0 0.0
        %592 = vmatmul.mubr.f32.gmra.mxu0 %v465
        %v593 = vpop.f32.mrf.mxu0
        %v594 = vadd.f32 0.0, %v593
        %v595 = vpop.f32.mrf.mxu0
        %v596 = vadd.f32 0.0, %v595
        %597 = vmatprep.mubr.f32.mxu0 0.0
        %598 = vmatmul.mubr.f32.gmra.mxu0 %v468
        %v599 = vpop.f32.mrf.mxu0
        %v600 = vadd.f32 0.0, %v599
        %v601 = vpop.f32.mrf.mxu0
        %v602 = vadd.f32 0.0, %v601
        %603 = vmatprep.mubr.f32.mxu0 0.0
        %604 = vmatmul.mubr.f32.gmra.mxu0 %v471
        %v605 = vpop.f32.mrf.mxu0
        %v606 = vadd.f32 0.0, %v605
        %v607 = vpop.f32.mrf.mxu0
        %v608 = vadd.f32 0.0, %v607
        %609 = vmatprep.mubr.f32.mxu0 0.0
        %610 = vmatmul.mubr.f32.gmra.mxu0 %v474
        %v611 = vpop.f32.mrf.mxu0
        %v612 = vadd.f32 0.0, %v611
        %v613 = vpop.f32.mrf.mxu0
        %v614 = vadd.f32 0.0, %v613
        %615 = vmatprep.mubr.f32.mxu0 0.0
        %616 = vmatmul.mubr.f32.gmra.mxu0 %v477
        %v617 = vpop.f32.mrf.mxu0
        %v618 = vadd.f32 0.0, %v617
        %v619 = vpop.f32.mrf.mxu0
        %v620 = vadd.f32 0.0, %v619
        %621 = vmatprep.mubr.f32.mxu0 0.0
        %622 = vmatmul.mubr.f32.gmra.mxu0 %v480
        %v623 = vpop.f32.mrf.mxu0
        %v624 = vadd.f32 0.0, %v623
        %v625 = vpop.f32.mrf.mxu0
        %v626 = vadd.f32 0.0, %v625
        %627 = vmatprep.mubr.f32.mxu0 0.0
        %628 = vmatmul.mubr.f32.gmra.mxu0 %v483
        %v629 = vpop.f32.mrf.mxu0
        %v630 = vadd.f32 0.0, %v629
        %v631 = vpop.f32.mrf.mxu0
        %v632 = vadd.f32 0.0, %v631
        %633 = vmatprep.mubr.f32.mxu0 0.0
        %634 = vmatmul.mubr.f32.gmra.mxu0 %v486
        %v635 = vpop.f32.mrf.mxu0
        %v636 = vadd.f32 0.0, %v635
        %v637 = vpop.f32.mrf.mxu0
        %v638 = vadd.f32 0.0, %v637
        %639 = vmatprep.mubr.f32.mxu0 0.0
        %640 = vmatmul.mubr.f32.gmra.mxu0 %v489
        %v641 = vpop.f32.mrf.mxu0
        %v642 = vadd.f32 0.0, %v641
        %v643 = vpop.f32.mrf.mxu0
        %v644 = vadd.f32 0.0, %v643
        %645 = vmatprep.mubr.f32.mxu0 0.0
        %646 = vmatmul.mubr.f32.gmra.mxu0 %v492
        %v647 = vpop.f32.mrf.mxu0
        %v648 = vadd.f32 0.0, %v647
        %v649 = vpop.f32.mrf.mxu0
        %v650 = vadd.f32 0.0, %v649
        %651 = vmatprep.mubr.f32.mxu0 0.0
        %652 = vmatmul.mubr.f32.gmra.mxu0 %v495
        %v653 = vpop.f32.mrf.mxu0
        %v654 = vadd.f32 0.0, %v653
        %v655 = vpop.f32.mrf.mxu0
        %v656 = vadd.f32 0.0, %v655
        %657 = vdwg.mxu0
        %658 = vmatprep.subr.mxu0 0.0
        %659 = vmatpush1.msra.mxu0 0.0
        %660 = vmatprep.subr.mxu0 0.0
        %661 = vmatpush1.msra.mxu0 0.0
        %662 = vmatprep.subr.mxu0 0.0
        %663 = vmatpush1.msra.mxu0 0.0
        %664 = vmatprep.subr.mxu0 0.0
        %665 = vmatpush1.msra.mxu0 0.0
        %666 = vmatprep.subr.mxu0 0.0
        %667 = vmatpush1.msra.mxu0 0.0
        %668 = vmatprep.subr.mxu0 0.0
        %669 = vmatpush1.msra.mxu0 0.0
        %670 = vmatprep.subr.mxu0 0.0
        %671 = vmatpush1.msra.mxu0 0.0
        %672 = vmatprep.subr.mxu0 0.0
        %673 = vmatpush1.msra.mxu0 0.0
        %674 = vmatprep.subr.mxu0 0.0
        %675 = vmatpush1.msra.mxu0 0.0
        %676 = vmatprep.subr.mxu0 0.0
        %677 = vmatpush1.msra.mxu0 0.0
        %678 = vmatprep.subr.mxu0 0.0
        %679 = vmatpush1.msra.mxu0 0.0
        %680 = vmatprep.subr.mxu0 0.0
        %681 = vmatpush1.msra.mxu0 0.0
        %682 = vmatprep.subr.mxu0 %v351
        %683 = vmatpush1.msra.mxu0 %v331
        %684 = vmatprep.subr.mxu0 %v350
        %685 = vmatpush1.msra.mxu0 %v330
        %686 = vmatprep.subr.mxu0 %v349
        %687 = vmatpush1.msra.mxu0 %v329
        %688 = vmatprep.subr.mxu0 %v348
        %689 = vmatpush1.msra.mxu0 %v328
        %690 = vmatprep.subr.mxu0 0.0
        %691 = vmatpush2.msra.mxu0 0.0
        %692 = vmatprep.subr.mxu0 0.0
        %693 = vmatpush2.msra.mxu0 0.0
        %694 = vmatprep.subr.mxu0 0.0
        %695 = vmatpush2.msra.mxu0 0.0
        %696 = vmatprep.subr.mxu0 0.0
        %697 = vmatpush2.msra.mxu0 0.0
        %698 = vmatprep.subr.mxu0 0.0
        %699 = vmatpush2.msra.mxu0 0.0
        %700 = vmatprep.subr.mxu0 0.0
        %701 = vmatpush2.msra.mxu0 0.0
        %702 = vmatprep.subr.mxu0 0.0
        %703 = vmatpush2.msra.mxu0 0.0
        %704 = vmatprep.subr.mxu0 0.0
        %705 = vmatpush2.msra.mxu0 0.0
        %706 = vmatprep.subr.mxu0 0.0
        %707 = vmatpush2.msra.mxu0 0.0
        %708 = vmatprep.subr.mxu0 0.0
        %709 = vmatpush2.msra.mxu0 0.0
        %710 = vmatprep.subr.mxu0 0.0
        %711 = vmatpush2.msra.mxu0 0.0
        %712 = vmatprep.subr.mxu0 0.0
        %713 = vmatpush2.msra.mxu0 0.0
        %714 = vmatprep.subr.mxu0 0.0
        %715 = vmatpush2.msra.mxu0 0.0
        %716 = vmatprep.subr.mxu0 0.0
        %717 = vmatpush2.msra.mxu0 0.0
        %718 = vmatprep.subr.mxu0 0.0
        %719 = vmatpush2.msra.mxu0 0.0
        %720 = vmatprep.subr.mxu0 0.0
        %721 = vmatpush2.msra.mxu0 0.0
        %722 = vmatprep.mubr.f32.mxu0 0.0
        %723 = vmatmul.mubr.f32.gmra.mxu0 %v450
        %v724 = vpop.f32.mrf.mxu0
        %v725 = vadd.f32 0.0, %v724
        %v726 = vpop.f32.mrf.mxu0
        %v727 = vadd.f32 0.0, %v726
        %728 = vmatprep.mubr.f32.mxu0 0.0
        %729 = vmatmul.mubr.f32.gmra.mxu0 %v453
        %v730 = vpop.f32.mrf.mxu0
        %v731 = vadd.f32 0.0, %v730
        %v732 = vpop.f32.mrf.mxu0
        %v733 = vadd.f32 0.0, %v732
        %734 = vmatprep.mubr.f32.mxu0 0.0
        %735 = vmatmul.mubr.f32.gmra.mxu0 %v456
        %v736 = vpop.f32.mrf.mxu0
        %v737 = vadd.f32 0.0, %v736
        %v738 = vpop.f32.mrf.mxu0
        %v739 = vadd.f32 0.0, %v738
        %740 = vmatprep.mubr.f32.mxu0 0.0
        %741 = vmatmul.mubr.f32.gmra.mxu0 %v459
        %v742 = vpop.f32.mrf.mxu0
        %v743 = vadd.f32 0.0, %v742
        %v744 = vpop.f32.mrf.mxu0
        %v745 = vadd.f32 0.0, %v744
        %746 = vmatprep.mubr.f32.mxu0 0.0
        %747 = vmatmul.mubr.f32.gmra.mxu0 %v462
        %v748 = vpop.f32.mrf.mxu0
        %v749 = vadd.f32 0.0, %v748
        %v750 = vpop.f32.mrf.mxu0
        %v751 = vadd.f32 0.0, %v750
        %752 = vmatprep.mubr.f32.mxu0 0.0
        %753 = vmatmul.mubr.f32.gmra.mxu0 %v465
        %v754 = vpop.f32.mrf.mxu0
        %v755 = vadd.f32 0.0, %v754
        %v756 = vpop.f32.mrf.mxu0
        %v757 = vadd.f32 0.0, %v756
        %758 = vmatprep.mubr.f32.mxu0 0.0
        %759 = vmatmul.mubr.f32.gmra.mxu0 %v468
        %v760 = vpop.f32.mrf.mxu0
        %v761 = vadd.f32 0.0, %v760
        %v762 = vpop.f32.mrf.mxu0
        %v763 = vadd.f32 0.0, %v762
        %764 = vmatprep.mubr.f32.mxu0 0.0
        %765 = vmatmul.mubr.f32.gmra.mxu0 %v471
        %v766 = vpop.f32.mrf.mxu0
        %v767 = vadd.f32 0.0, %v766
        %v768 = vpop.f32.mrf.mxu0
        %v769 = vadd.f32 0.0, %v768
        %770 = vmatprep.mubr.f32.mxu0 0.0
        %771 = vmatmul.mubr.f32.gmra.mxu0 %v474
        %v772 = vpop.f32.mrf.mxu0
        %v773 = vadd.f32 0.0, %v772
        %v774 = vpop.f32.mrf.mxu0
        %v775 = vadd.f32 0.0, %v774
        %776 = vmatprep.mubr.f32.mxu0 0.0
        %777 = vmatmul.mubr.f32.gmra.mxu0 %v477
        %v778 = vpop.f32.mrf.mxu0
        %v779 = vadd.f32 0.0, %v778
        %v780 = vpop.f32.mrf.mxu0
        %v781 = vadd.f32 0.0, %v780
        %782 = vmatprep.mubr.f32.mxu0 0.0
        %783 = vmatmul.mubr.f32.gmra.mxu0 %v480
        %v784 = vpop.f32.mrf.mxu0
        %v785 = vadd.f32 0.0, %v784
        %v786 = vpop.f32.mrf.mxu0
        %v787 = vadd.f32 0.0, %v786
        %788 = vmatprep.mubr.f32.mxu0 0.0
        %789 = vmatmul.mubr.f32.gmra.mxu0 %v483
        %v790 = vpop.f32.mrf.mxu0
        %v791 = vadd.f32 0.0, %v790
        %v792 = vpop.f32.mrf.mxu0
        %v793 = vadd.f32 0.0, %v792
        %794 = vmatprep.mubr.f32.mxu0 0.0
        %795 = vmatmul.mubr.f32.gmra.mxu0 %v486
        %v796 = vpop.f32.mrf.mxu0
        %v797 = vadd.f32 0.0, %v796
        %v798 = vpop.f32.mrf.mxu0
        %v799 = vadd.f32 0.0, %v798
        %800 = vmatprep.mubr.f32.mxu0 0.0
        %801 = vmatmul.mubr.f32.gmra.mxu0 %v489
        %v802 = vpop.f32.mrf.mxu0
        %v803 = vadd.f32 0.0, %v802
        %v804 = vpop.f32.mrf.mxu0
        %v805 = vadd.f32 0.0, %v804
        %806 = vmatprep.mubr.f32.mxu0 0.0
        %807 = vmatmul.mubr.f32.gmra.mxu0 %v492
        %v808 = vpop.f32.mrf.mxu0
        %v809 = vadd.f32 0.0, %v808
        %v810 = vpop.f32.mrf.mxu0
        %v811 = vadd.f32 0.0, %v810
        %812 = vmatprep.mubr.f32.mxu0 0.0
        %813 = vmatmul.mubr.f32.gmra.mxu0 %v495
        %v814 = vpop.f32.mrf.mxu0
        %v815 = vadd.f32 0.0, %v814
        %v816 = vpop.f32.mrf.mxu0
        %v817 = vadd.f32 0.0, %v816
        %818 = vdwg.mxu0
        %v819 = vadd.f32 %v352, %v564
        %v820 = vadd.f32 %v353, %v566
        %v821 = vadd.f32 %v354, %v725
        %v822 = vadd.f32 %v355, %v727
        %v823 = vadd.f32 %v356, %v570
        %v824 = vadd.f32 %v357, %v572
        %v825 = vadd.f32 %v358, %v731
        %v826 = vadd.f32 %v359, %v733
        %v827 = vadd.f32 %v360, %v576
        %v828 = vadd.f32 %v361, %v578
        %v829 = vadd.f32 %v362, %v737
        %v830 = vadd.f32 %v363, %v739
        %v831 = vadd.f32 %v364, %v582
        %v832 = vadd.f32 %v365, %v584
        %v833 = vadd.f32 %v366, %v743
        %v834 = vadd.f32 %v367, %v745
        %v835 = vadd.f32 %v368, %v588
        %v836 = vadd.f32 %v369, %v590
        %v837 = vadd.f32 %v370, %v749
        %v838 = vadd.f32 %v371, %v751
        %v839 = vadd.f32 %v372, %v594
        %v840 = vadd.f32 %v373, %v596
        %v841 = vadd.f32 %v374, %v755
        %v842 = vadd.f32 %v375, %v757
        %v843 = vadd.f32 %v376, %v600
        %v844 = vadd.f32 %v377, %v602
        %v845 = vadd.f32 %v378, %v761
        %v846 = vadd.f32 %v379, %v763
        %v847 = vadd.f32 %v380, %v606
        %v848 = vadd.f32 %v381, %v608
        %v849 = vadd.f32 %v382, %v767
        %v850 = vadd.f32 %v383, %v769
        %v851 = vadd.f32 %v384, %v612
        %v852 = vadd.f32 %v385, %v614
        %v853 = vadd.f32 %v386, %v773
        %v854 = vadd.f32 %v387, %v775
        %v855 = vadd.f32 %v388, %v618
        %v856 = vadd.f32 %v389, %v620
        %v857 = vadd.f32 %v390, %v779
        %v858 = vadd.f32 %v391, %v781
        %v859 = vadd.f32 %v392, %v624
        %v860 = vadd.f32 %v393, %v626
        %v861 = vadd.f32 %v394, %v785
        %v862 = vadd.f32 %v395, %v787
        %v863 = vadd.f32 %v396, %v630
        %v864 = vadd.f32 %v397, %v632
        %v865 = vadd.f32 %v398, %v791
        %v866 = vadd.f32 %v399, %v793
        %v867 = vadd.f32 %v400, %v636
        %v868 = vadd.f32 %v401, %v638
        %v869 = vadd.f32 %v402, %v797
        %v870 = vadd.f32 %v403, %v799
        %v871 = vadd.f32 %v404, %v642
        %v872 = vadd.f32 %v405, %v644
        %v873 = vadd.f32 %v406, %v803
        %v874 = vadd.f32 %v407, %v805
        %v875 = vadd.f32 %v408, %v648
        %v876 = vadd.f32 %v409, %v650
        %v877 = vadd.f32 %v410, %v809
        %v878 = vadd.f32 %v411, %v811
        %v879 = vadd.f32 %v412, %v654
        %v880 = vadd.f32 %v413, %v656
        %v881 = vadd.f32 %v414, %v815
        %v882 = vadd.f32 %v415, %v817
        %883 = vst [vmem:[%s175] sm:$0xff] %v819
        %884 = vst [vmem:[%s175 + $0x8] sm:$0xff] %v820
        %885 = vst [vmem:[%s175 + $0x10] sm:$0xff] %v821
        %886 = vst [vmem:[%s175 + $0x18] sm:$0xff] %v822
        %887 = vst [vmem:[%s175 + $0x20] sm:$0xff] %v823
        %888 = vst [vmem:[%s175 + $0x28] sm:$0xff] %v824
        %889 = vst [vmem:[%s175 + $0x30] sm:$0xff] %v825
        %890 = vst [vmem:[%s175 + $0x38] sm:$0xff] %v826
        %891 = vst [vmem:[%s175 + $0x40] sm:$0xff] %v827
        %892 = vst [vmem:[%s175 + $0x48] sm:$0xff] %v828
        %893 = vst [vmem:[%s175 + $0x50] sm:$0xff] %v829
        %894 = vst [vmem:[%s175 + $0x58] sm:$0xff] %v830
        %895 = vst [vmem:[%s175 + $0x60] sm:$0xff] %v831
        %896 = vst [vmem:[%s175 + $0x68] sm:$0xff] %v832
        %897 = vst [vmem:[%s175 + $0x70] sm:$0xff] %v833
        %898 = vst [vmem:[%s175 + $0x78] sm:$0xff] %v834
        %899 = vst [vmem:[%s175 + $0x80] sm:$0xff] %v835
        %900 = vst [vmem:[%s175 + $0x88] sm:$0xff] %v836
        %901 = vst [vmem:[%s175 + $0x90] sm:$0xff] %v837
        %902 = vst [vmem:[%s175 + $0x98] sm:$0xff] %v838
        %903 = vst [vmem:[%s175 + $0xa0] sm:$0xff] %v839
        %904 = vst [vmem:[%s175 + $0xa8] sm:$0xff] %v840
        %905 = vst [vmem:[%s175 + $0xb0] sm:$0xff] %v841
        %906 = vst [vmem:[%s175 + $0xb8] sm:$0xff] %v842
        %907 = vst [vmem:[%s175 + $0xc0] sm:$0xff] %v843
        %908 = vst [vmem:[%s175 + $0xc8] sm:$0xff] %v844
        %909 = vst [vmem:[%s175 + $0xd0] sm:$0xff] %v845
        %910 = vst [vmem:[%s175 + $0xd8] sm:$0xff] %v846
        %911 = vst [vmem:[%s175 + $0xe0] sm:$0xff] %v847
        %912 = vst [vmem:[%s175 + $0xe8] sm:$0xff] %v848
        %913 = vst [vmem:[%s175 + $0xf0] sm:$0xff] %v849
        %914 = vst [vmem:[%s175 + $0xf8] sm:$0xff] %v850
        %915 = vst [vmem:[%s175 + $0x100] sm:$0xff] %v851
        %916 = vst [vmem:[%s175 + $0x108] sm:$0xff] %v852
        %917 = vst [vmem:[%s175 + $0x110] sm:$0xff] %v853
        %918 = vst [vmem:[%s175 + $0x118] sm:$0xff] %v854
        %919 = vst [vmem:[%s175 + $0x120] sm:$0xff] %v855
        %920 = vst [vmem:[%s175 + $0x128] sm:$0xff] %v856
        %921 = vst [vmem:[%s175 + $0x130] sm:$0xff] %v857
        %922 = vst [vmem:[%s175 + $0x138] sm:$0xff] %v858
        %923 = vst [vmem:[%s175 + $0x140] sm:$0xff] %v859
        %924 = vst [vmem:[%s175 + $0x148] sm:$0xff] %v860
        %925 = vst [vmem:[%s175 + $0x150] sm:$0xff] %v861
        %926 = vst [vmem:[%s175 + $0x158] sm:$0xff] %v862
        %927 = vst [vmem:[%s175 + $0x160] sm:$0xff] %v863
        %928 = vst [vmem:[%s175 + $0x168] sm:$0xff] %v864
        %929 = vst [vmem:[%s175 + $0x170] sm:$0xff] %v865
        %930 = vst [vmem:[%s175 + $0x178] sm:$0xff] %v866
        %931 = vst [vmem:[%s175 + $0x180] sm:$0xff] %v867
        %932 = vst [vmem:[%s175 + $0x188] sm:$0xff] %v868
        %933 = vst [vmem:[%s175 + $0x190] sm:$0xff] %v869
        %934 = vst [vmem:[%s175 + $0x198] sm:$0xff] %v870
        %935 = vst [vmem:[%s175 + $0x1a0] sm:$0xff] %v871
        %936 = vst [vmem:[%s175 + $0x1a8] sm:$0xff] %v872
        %937 = vst [vmem:[%s175 + $0x1b0] sm:$0xff] %v873
        %938 = vst [vmem:[%s175 + $0x1b8] sm:$0xff] %v874
        %939 = vst [vmem:[%s175 + $0x1c0] sm:$0xff] %v875
        %940 = vst [vmem:[%s175 + $0x1c8] sm:$0xff] %v876
        %941 = vst [vmem:[%s175 + $0x1d0] sm:$0xff] %v877
        %942 = vst [vmem:[%s175 + $0x1d8] sm:$0xff] %v878
        %943 = vst [vmem:[%s175 + $0x1e0] sm:$0xff] %v879
        %944 = vst [vmem:[%s175 + $0x1e8] sm:$0xff] %v880
        %945 = vst [vmem:[%s175 + $0x1f0] sm:$0xff] %v881
        %946 = vst [vmem:[%s175 + $0x1f8] sm:$0xff] %v882
        %s947 = sand.u32 %s92, 1
        %s948 = scalar_lea.sflag [#allocation3], %s947
        %s949 = sand.u32 %s92, 1
        %s950 = smul.addr %s949, 512
        %s951 = scalar_lea.vmem [#allocation2], %s950
        // Predicated region
        $region33: #{tpu_custom_call.1} parent=27 // pred_check
          %p952 = pneg %p102
        $region34: #{tpu_custom_call.1} parent=27 // pred_check_branch
          %954 = sbr.rel (%p952) target = $region36
        $region35: #{tpu_custom_call.1} parent=27 // pred_region
          %s956 = ssub.s32 8192, 8192
          %957 = vsyncadd %s948, %s956
          %s958 = smul.addr %s20, 64
          %s959 = smul.addr %s958, 128
          %s960 = scalar_lea.hbm %s2, %s959
          %s961 = sshll.u32 %s951, 4
          %s962 = int_to_ptr.vmem [resolvable:$true] %s961
          %967 = dma.vmem_to_hbm [thread:$0]  %s962, 8192, %s960, %s948, 512, 512, 32
        $region36: #{tpu_custom_call.1} parent=27 // pred_fallthru
          _
      $region28: #{tpu_custom_call.1} parent=5 // pred_fallthru
        _
      %p968 = scmp.le.s32.totalorder 2, %s11
      // Predicated region
      $region37: #{tpu_custom_call.1} parent=5 // pred_check
        %p969 = pneg %p968
      $region38: #{tpu_custom_call.1} parent=5 // pred_check_branch
        %971 = sbr.rel (%p969) target = $region40
      $region39: #{tpu_custom_call.1} parent=5 // pred_region
        %s972 = ssub.s32 %s11, 2
        // Predicated region
        $region41: #{tpu_custom_call.1} parent=39 // pred_check
          %p973 = pneg %p108
        $region42: #{tpu_custom_call.1} parent=39 // pred_check_branch
          %975 = sbr.rel (%p973) target = $region44
        $region43: #{tpu_custom_call.1} parent=39 // pred_region
          %s976 = sand.u32 %s93, 1
          %s977 = scalar_lea.sflag [#allocation3], %s976
          %s978 = sand.u32 %s93, 1
          %s979 = smul.addr %s978, 512
          %s980 = scalar_lea.vmem [#allocation2], %s979
          %981 = dma.done %s977, 8192
        $region44: #{tpu_custom_call.1} parent=39 // pred_fallthru
          _
      $region40: #{tpu_custom_call.1} parent=5 // pred_fallthru
        _
    $region6: #{tpu_custom_call.1} parent=1 // loop_footer
      %s15 = sadd.s32 1, %s11
    $region7: #{tpu_custom_call.1} parent=1 // loop_footer_branch
      %10 = sbr.rel target = $region3
    $region8: #{tpu_custom_call.1} parent=1 // loop_exit
      _
    %982 = vsyncpa [#allocation3], 1
    %s983 = scalar_lea.sflag [#allocation3], 1
    %984 = vsyncpa %s983, 1

</llo_original>
